<compile_context>
chip_gen: v6e
topology: v6e:2x2x1
jax: 0.10.0
libtpu: 0.0.40
codegen_flags: <defaults>
</compile_context>

<pallas_src>
import numpy as np
import jax
import jax.numpy as jnp
from jax import lax
from jax.experimental import pallas as pl
from jax.experimental.pallas import tpu as pltpu


# ----------------------------------------------------------------------------
# Pallas kernel: one batch element per grid step.
# refs:
#   x_ref    (1, S, H)  encoder outputs (native dtype, e.g. bf16)
#   w_ref    (3, H)     bound_classifier weight, lane-dense (torch layout)
#   bcol_ref (1, 3)     bias, column-orientation broadcast
#   brow_ref (3, 1)     bias, row-orientation broadcast
#   tri_ref  (S, S)     upper-triangular ones, tri[i, j] = 1.0 iff i <= j (grid-invariant)
#   ns_ref   (1, S, 1)  additive start-validity bias: 0.0 valid / -inf invalid
#   ne_ref   (1, 1, S)  additive end-validity  bias: 0.0 valid / -inf invalid
#   o_ref    (1, S, S)  output mention scores
# ----------------------------------------------------------------------------
def _mention_scores_kernel(x_ref, w_ref, bcol_ref, brow_ref, tri_ref, ns_ref, ne_ref, o_ref):
    f32 = jnp.float32
    neg_inf = jnp.float32(float("-inf"))

    x = x_ref[0].astype(f32)        # (S, H)  single in-VMEM upcast (HBM stream stays bf16)
    w = w_ref[...].astype(f32)      # (3, H)
    tri = tri_ref[...]              # (S, S)  tri[i, j] = [i <= j]

    # Contract on H for both orientations (keeps the weight lane-dense; same QK^T-style
    # last-dim contraction the MXU handles natively).  logit order: 0=start, 1=end, 2=mention.
    dn = (((1,), (1,)), ((), ()))
    logits_c = lax.dot_general(x, w, dn, preferred_element_type=f32) + bcol_ref[...]  # (S, 3)
    logits_r = lax.dot_general(w, x, dn, preferred_element_type=f32) + brow_ref[...]  # (3, S)

    # Cumulative sums of the mention logprobs on the MXU:
    #   incl_row[j] = sum_{k <= j} m[k]         (inclusive cumsum, row orientation)
    #   excl_col[i] = sum_{k <  i} m[k]         (exclusive cumsum, column orientation)
    # NOTE: cumsums use the *unmasked* mention logprobs; for prefix (left-contiguous)
    # context masks this matches the reference exactly (invalid cells end up -inf anyway).
    incl_row = jnp.dot(logits_r, tri, preferred_element_type=f32)[2:3, :]      # (1, S)
    total_c = jnp.sum(logits_c, axis=0, keepdims=True)                          # (1, 3)
    suffix_c = jnp.dot(tri, logits_c, preferred_element_type=f32)               # (S, 3) sum_{k>=i}
    excl_col = (total_c - suffix_c)[:, 2:3]                                     # (S, 1)

    # Fold validity into per-start / per-end terms (additive 0 / -inf biases):
    #   score[i, j] = (start[i] - excl[i]) + (end[j] + incl[j])
    h_col = logits_c[:, 0:1] - excl_col + ns_ref[0]     # (S, 1)
    g_row = logits_r[1:2, :] + incl_row + ne_ref[0]     # (1, S)

    # Only the mention-size > 0 (j >= i) mask remains; reuse the resident triangle.
    o_ref[0] = jnp.where(tri > 0.0, h_col + g_row, neg_inf)


# ----------------------------------------------------------------------------
# Wrapper: token start/end masks, validity folding, pallas_call, mention-size filter.
# ----------------------------------------------------------------------------
def mention_scores_head(text_encodings, mask_ctxt, tokens_mapping, weight, bias,
                        max_mention_length=10):
    """weight: (3, H) torch layout; bias: (3,). text_encodings kept in its native dtype."""
    f32 = jnp.float32
    B, S, H = text_encodings.shape
    neg_inf = float("-inf")

    # token start / end scatter masks (glue: data-dependent scatter from tokens_mapping)
    pos = jnp.arange(S, dtype=jnp.int32)
    tstart = jnp.any(tokens_mapping[:, :, 0][:, :, None] == pos[None, None, :], axis=1)
    tstart = tstart.at[:, 0].set(False)                                   # (B, S)
    tend = jnp.any((tokens_mapping[:, :, 1] - 1)[:, :, None] == pos[None, None, :], axis=1)
    tend = tend.at[:, 0].set(False)                                       # (B, S)

    # fold mask_ctxt + token start/end validity into additive 0 / -inf biases
    valid_start = tstart & (mask_ctxt == 1)
    valid_end = tend & (mask_ctxt == 1)
    ns = jnp.where(valid_start, 0.0, neg_inf).astype(f32)[:, :, None]     # (B, S, 1)
    ne = jnp.where(valid_end, 0.0, neg_inf).astype(f32)[:, None, :]       # (B, 1, S)

    w = jnp.asarray(weight, f32)                                          # (3, H) lane-dense
    b_col = jnp.asarray(bias, f32).reshape(1, 3)
    b_row = jnp.asarray(bias, f32).reshape(3, 1)

    # grid-invariant upper-triangular ones: cumsum operator + (j >= i) mask, stays VMEM-resident
    idx = np.arange(S)
    tri = jnp.asarray((idx[:, None] <= idx[None, :]).astype(np.float32))  # (S, S)

    scores_full = pl.pallas_call(
        _mention_scores_kernel,
        out_shape=jax.ShapeDtypeStruct((B, S, S), f32),
        grid_spec=pltpu.PrefetchScalarGridSpec(
            num_scalar_prefetch=0,
            grid=(B,),
            in_specs=[
                pl.BlockSpec((1, S, H), lambda b: (b, 0, 0)),   # x (native dtype)
                pl.BlockSpec((3, H), lambda b: (0, 0)),         # weight
                pl.BlockSpec((1, 3), lambda b: (0, 0)),         # bias (col orientation)
                pl.BlockSpec((3, 1), lambda b: (0, 0)),         # bias (row orientation)
                pl.BlockSpec((S, S), lambda b: (0, 0)),         # triangle
                pl.BlockSpec((1, S, 1), lambda b: (b, 0, 0)),   # start-validity bias
                pl.BlockSpec((1, 1, S), lambda b: (b, 0, 0)),   # end-validity bias
            ],
            out_specs=pl.BlockSpec((1, S, S), lambda b: (b, 0, 0)),
        ),
        compiler_params=pltpu.CompilerParams(dimension_semantics=("parallel",)),
    )(text_encodings, w, b_col, b_row, tri, ns, ne)

    # filter_by_mention_size: (j - i) <= max_mention_length. Bounds / keep-mask are
    # batch-invariant and fully static, so this ragged gather is XLA-side glue.
    ii, jj = np.meshgrid(np.arange(S), np.arange(S), indexing="ij")
    kept_idx = np.nonzero(((jj - ii) <= max_mention_length).reshape(-1))[0]
    bounds_full = np.stack([ii.reshape(-1), jj.reshape(-1)], axis=-1).astype(np.int32)

    mention_scores = scores_full.reshape(B, S * S)[:, kept_idx]                         # (B, K)
    mention_bounds = jnp.broadcast_to(
        jnp.asarray(bounds_full[kept_idx], jnp.int32)[None], (B, kept_idx.shape[0], 2))  # (B, K, 2)
    return mention_scores, mention_bounds


# ----------------------------------------------------------------------------
# Pure-JAX reference (mirrors the PyTorch forward) for a sanity check.
# ----------------------------------------------------------------------------
def _reference(text_encodings, mask_ctxt, tokens_mapping, weight, bias, max_mention_length):
    f32 = jnp.float32
    B, S, H = text_encodings.shape
    logits = jnp.einsum("bsh,oh->bso", text_encodings.astype(f32), jnp.asarray(weight, f32),
                        precision=lax.Precision.HIGHEST) + jnp.asarray(bias, f32)
    valid_tok = mask_ctxt == 1
    neg_inf = jnp.float32(float("-inf"))
    start = jnp.where(valid_tok, logits[..., 0], neg_inf)
    end = jnp.where(valid_tok, logits[..., 1], neg_inf)
    ment = jnp.where(valid_tok, logits[..., 2], neg_inf)
    incl = jnp.cumsum(ment, axis=1)
    excl = jnp.concatenate([jnp.zeros((B, 1), f32), incl[:, :-1]], axis=1)
    scores = (start[:, :, None] + end[:, None, :]) + (incl[:, None, :] - excl[:, :, None])

    pos = jnp.arange(S, dtype=jnp.int32)
    starts = jnp.any(tokens_mapping[:, :, 0][:, :, None] == pos[None, None, :], axis=1)
    starts = starts.at[:, 0].set(False)
    ends = jnp.any((tokens_mapping[:, :, 1] - 1)[:, :, None] == pos[None, None, :], axis=1)
    ends = ends.at[:, 0].set(False)

    ii, jj = jnp.meshgrid(jnp.arange(S), jnp.arange(S), indexing="ij")
    valid = (jj >= ii)[None] & (mask_ctxt > 0)[:, :, None] & starts[:, :, None] & ends[:, None, :]
    scores = jnp.where(valid, scores, neg_inf)

    ii_n, jj_n = np.meshgrid(np.arange(S), np.arange(S), indexing="ij")
    kept_idx = np.nonzero(((jj_n - ii_n) <= max_mention_length).reshape(-1))[0]
    bounds_full = np.stack([ii_n.reshape(-1), jj_n.reshape(-1)], axis=-1).astype(np.int32)
    return scores.reshape(B, S * S)[:, kept_idx], bounds_full[kept_idx]


if __name__ == "__main__":
    B, S, H, T = 2, 16, 32, 5
    MAX_MENTION_LENGTH = 10

    key = jax.random.PRNGKey(0)
    k_x, k_w, k_b = jax.random.split(key, 3)

    # encoder activations in bf16 (native dtype streamed straight into the kernel)
    text_encodings = jax.random.normal(k_x, (B, S, H), dtype=jnp.float32).astype(jnp.bfloat16)

    # deterministic nn.Linear(H, 3)-style init
    bound = 1.0 / np.sqrt(H)
    weight = jax.random.uniform(k_w, (3, H), minval=-bound, maxval=bound, dtype=jnp.float32)
    bias = jax.random.uniform(k_b, (3,), minval=-bound, maxval=bound, dtype=jnp.float32)

    # prefix context masks of lengths 14 and 10
    lengths = np.array([14, 10])
    mask_ctxt = jnp.asarray((np.arange(S)[None, :] < lengths[:, None]).astype(np.int32))

    # tokens_mapping[b, t] = [subword_start, subword_end_exclusive]
    tm = np.zeros((B, T, 2), dtype=np.int32)
    for b in range(B):
        for t in range(T):
            tm[b, t, 0] = 1 + 2 * t + b
            tm[b, t, 1] = 3 + 2 * t + b
    tokens_mapping = jnp.asarray(tm)

    mention_scores, mention_bounds = mention_scores_head(
        text_encodings, mask_ctxt, tokens_mapping, weight, bias, MAX_MENTION_LENGTH)
    mention_scores = jax.block_until_ready(mention_scores)
    mention_bounds = jax.block_until_ready(mention_bounds)

    # sanity check against a pure-JAX reference of the same forward pass
    ref_scores, ref_bounds = _reference(
        text_encodings, mask_ctxt, tokens_mapping, weight, bias, MAX_MENTION_LENGTH)
    ref_scores = np.asarray(jax.block_until_ready(ref_scores))
    got_scores = np.asarray(mention_scores)

    assert got_scores.shape == ref_scores.shape
    assert np.asarray(mention_bounds).shape == (B,) + ref_bounds.shape
    assert np.array_equal(np.asarray(mention_bounds)[0], ref_bounds)
    assert not np.any(np.isnan(got_scores)), "kernel produced NaN"
    assert np.array_equal(np.isneginf(got_scores), np.isneginf(ref_scores)), \
        "-inf (validity) pattern mismatch vs reference"
    # tolerance leaves headroom for MXU multi-pass f32 accumulation order differences
    assert np.allclose(got_scores, ref_scores, rtol=1e-2, atol=1e-2), \
        "kernel output mismatch vs reference"

    print("KERNEL_OK")
</pallas_src>

<mosaic_0001>
module attributes {stable_mosaic.version = 11 : i64} {
  func.func @_mention_scores_kernel(%arg0: i32, %arg1: memref<1x16x32xbf16, #tpu.memory_space<vmem>>, %arg2: memref<3x32xf32, #tpu.memory_space<vmem>>, %arg3: memref<1x3xf32, #tpu.memory_space<vmem>>, %arg4: memref<3x1xf32, #tpu.memory_space<vmem>>, %arg5: memref<16x16xf32, #tpu.memory_space<vmem>>, %arg6: memref<1x16x1xf32, #tpu.memory_space<vmem>>, %arg7: memref<1x1x16xf32, #tpu.memory_space<vmem>>, %arg8: memref<1x16x16xf32, #tpu.memory_space<vmem>>) attributes {dimension_semantics = [#tpu.dimension_semantics<parallel>], iteration_bounds = array<i64: 2>, scalar_prefetch = 0 : i64, scratch_operands = 0 : i64, tpu.core_type = #tpu.core_type<tc>, window_params = [{transform_indices = @transform_0, window_bounds = array<i64: 1, 16, 32>}, {pipeline_mode = #tpu.pipeline_mode<synchronous>, transform_indices = @transform_1, window_bounds = array<i64: 3, 32>}, {pipeline_mode = #tpu.pipeline_mode<synchronous>, transform_indices = @transform_2, window_bounds = array<i64: 1, 3>}, {pipeline_mode = #tpu.pipeline_mode<synchronous>, transform_indices = @transform_3, window_bounds = array<i64: 3, 1>}, {pipeline_mode = #tpu.pipeline_mode<synchronous>, transform_indices = @transform_4, window_bounds = array<i64: 16, 16>}, {transform_indices = @transform_5, window_bounds = array<i64: 1, 16, 1>}, {transform_indices = @transform_6, window_bounds = array<i64: 1, 1, 16>}, {transform_indices = @transform_7, window_bounds = array<i64: 1, 16, 16>}]} {
    %c0 = arith.constant 0 : index
    %c0_0 = arith.constant 0 : index
    %c0_1 = arith.constant 0 : index
    %0 = vector.load %arg1[%c0, %c0_0, %c0_1] : memref<1x16x32xbf16, #tpu.memory_space<vmem>>, vector<1x16x32xbf16>
    %1 = vector.shape_cast %0 : vector<1x16x32xbf16> to vector<16x32xbf16>
    %2 = arith.extf %1 : vector<16x32xbf16> to vector<16x32xf32>
    %c0_2 = arith.constant 0 : index
    %c0_3 = arith.constant 0 : index
    %3 = vector.load %arg2[%c0_2, %c0_3] : memref<3x32xf32, #tpu.memory_space<vmem>>, vector<3x32xf32>
    %c0_4 = arith.constant 0 : index
    %c0_5 = arith.constant 0 : index
    %4 = vector.load %arg5[%c0_4, %c0_5] : memref<16x16xf32, #tpu.memory_space<vmem>>, vector<16x16xf32>
    %cst = arith.constant dense<0.000000e+00> : vector<16x3xf32>
    %5 = tpu.matmul %2, %3, %cst {dimension_numbers = #tpu.dot_dimension_numbers<[1], [1], [0], [0], [0, 0, 1, 0], [], []>} : vector<16x32xf32>, vector<3x32xf32>, vector<16x3xf32> -> vector<16x3xf32>
    %c0_6 = arith.constant 0 : index
    %c0_7 = arith.constant 0 : index
    %6 = vector.load %arg3[%c0_6, %c0_7] : memref<1x3xf32, #tpu.memory_space<vmem>>, vector<1x3xf32>
    %7 = vector.broadcast %6 : vector<1x3xf32> to vector<16x3xf32>
    %8 = arith.addf %5, %7 : vector<16x3xf32>
    %cst_8 = arith.constant dense<0.000000e+00> : vector<3x16xf32>
    %9 = tpu.matmul %3, %2, %cst_8 {dimension_numbers = #tpu.dot_dimension_numbers<[1], [1], [0], [0], [0, 0, 1, 0], [], []>} : vector<3x32xf32>, vector<16x32xf32>, vector<3x16xf32> -> vector<3x16xf32>
    %c0_9 = arith.constant 0 : index
    %c0_10 = arith.constant 0 : index
    %10 = vector.load %arg4[%c0_9, %c0_10] : memref<3x1xf32, #tpu.memory_space<vmem>>, vector<3x1xf32>
    %11 = vector.broadcast %10 : vector<3x1xf32> to vector<3x16xf32>
    %12 = arith.addf %9, %11 : vector<3x16xf32>
    %cst_11 = arith.constant dense<0.000000e+00> : vector<3x16xf32>
    %13 = tpu.matmul %12, %4, %cst_11 {dimension_numbers = #tpu.dot_dimension_numbers<[1], [0], [0], [1], [0, 0, 1, 1], [], []>} : vector<3x16xf32>, vector<16x16xf32>, vector<3x16xf32> -> vector<3x16xf32>
    %14 = vector.extract_strided_slice %13 {offsets = [2, 0], sizes = [1, 16], strides = [1, 1]} : vector<3x16xf32> to vector<1x16xf32>
    %cst_12 = arith.constant dense<0.000000e+00> : vector<3xf32>
    %15 = vector.multi_reduction <add>, %8, %cst_12 [0] : vector<16x3xf32> to vector<3xf32>
    %16 = vector.shape_cast %15 : vector<3xf32> to vector<1x3xf32>
    %cst_13 = arith.constant dense<0.000000e+00> : vector<16x3xf32>
    %17 = tpu.matmul %4, %8, %cst_13 {dimension_numbers = #tpu.dot_dimension_numbers<[1], [0], [0], [1], [0, 0, 1, 1], [], []>} : vector<16x16xf32>, vector<16x3xf32>, vector<16x3xf32> -> vector<16x3xf32>
    %18 = vector.broadcast %16 : vector<1x3xf32> to vector<16x3xf32>
    %19 = arith.subf %18, %17 : vector<16x3xf32>
    %20 = vector.extract_strided_slice %19 {offsets = [0, 2], sizes = [16, 1], strides = [1, 1]} : vector<16x3xf32> to vector<16x1xf32>
    %21 = vector.extract_strided_slice %8 {offsets = [0, 0], sizes = [16, 1], strides = [1, 1]} : vector<16x3xf32> to vector<16x1xf32>
    %22 = arith.subf %21, %20 : vector<16x1xf32>
    %c0_14 = arith.constant 0 : index
    %c0_15 = arith.constant 0 : index
    %c0_16 = arith.constant 0 : index
    %23 = vector.load %arg6[%c0_14, %c0_15, %c0_16] : memref<1x16x1xf32, #tpu.memory_space<vmem>>, vector<1x16x1xf32>
    %24 = vector.shape_cast %23 : vector<1x16x1xf32> to vector<16x1xf32>
    %25 = arith.addf %22, %24 : vector<16x1xf32>
    %26 = vector.extract_strided_slice %12 {offsets = [1, 0], sizes = [1, 16], strides = [1, 1]} : vector<3x16xf32> to vector<1x16xf32>
    %27 = arith.addf %26, %14 : vector<1x16xf32>
    %c0_17 = arith.constant 0 : index
    %c0_18 = arith.constant 0 : index
    %c0_19 = arith.constant 0 : index
    %28 = vector.load %arg7[%c0_17, %c0_18, %c0_19] : memref<1x1x16xf32, #tpu.memory_space<vmem>>, vector<1x1x16xf32>
    %29 = vector.shape_cast %28 : vector<1x1x16xf32> to vector<1x16xf32>
    %30 = arith.addf %27, %29 : vector<1x16xf32>
    %cst_20 = arith.constant 0.000000e+00 : f32
    %31 = vector.broadcast %cst_20 : f32 to vector<16x16xf32>
    %32 = arith.cmpf ogt, %4, %31 : vector<16x16xf32>
    %33 = vector.broadcast %25 : vector<16x1xf32> to vector<16x16xf32>
    %34 = vector.broadcast %30 : vector<1x16xf32> to vector<16x16xf32>
    %35 = arith.addf %33, %34 : vector<16x16xf32>
    %cst_21 = arith.constant 0xFF800000 : f32
    %36 = vector.broadcast %cst_21 : f32 to vector<16x16xf32>
    %37 = arith.select %32, %35, %36 : vector<16x16xi1>, vector<16x16xf32>
    %c0_22 = arith.constant 0 : index
    %c0_23 = arith.constant 0 : index
    %c0_24 = arith.constant 0 : index
    %38 = vector.load %arg8[%c0_22, %c0_23, %c0_24] : memref<1x16x16xf32, #tpu.memory_space<vmem>>, vector<1x16x16xf32>
    %39 = vector.shape_cast %38 : vector<1x16x16xf32> to vector<16x16xf32>
    %40 = vector.shape_cast %37 : vector<16x16xf32> to vector<1x16x16xf32>
    tpu.vector_store %arg8[%c0_22, %c0_23, %c0_24], %40 {strides = array<i32>} : memref<1x16x16xf32, #tpu.memory_space<vmem>>, vector<1x16x16xf32>,
    return
  }
  func.func @transform_0(%arg0: i32) -> (i32, i32, i32) {
    %c0_i32 = arith.constant 0 : i32
    %c0_i32_0 = arith.constant 0 : i32
    %c0_i32_1 = arith.constant 0 : i32
    return %arg0, %c0_i32, %c0_i32_0 : i32, i32, i32
  }
  func.func @transform_1(%arg0: i32) -> (i32, i32) {
    %c0_i32 = arith.constant 0 : i32
    %c0_i32_0 = arith.constant 0 : i32
    %c0_i32_1 = arith.constant 0 : i32
    return %c0_i32, %c0_i32_0 : i32, i32
  }
  func.func @transform_2(%arg0: i32) -> (i32, i32) {
    %c0_i32 = arith.constant 0 : i32
    %c0_i32_0 = arith.constant 0 : i32
    %c0_i32_1 = arith.constant 0 : i32
    return %c0_i32, %c0_i32_0 : i32, i32
  }
  func.func @transform_3(%arg0: i32) -> (i32, i32) {
    %c0_i32 = arith.constant 0 : i32
    %c0_i32_0 = arith.constant 0 : i32
    %c0_i32_1 = arith.constant 0 : i32
    return %c0_i32, %c0_i32_0 : i32, i32
  }
  func.func @transform_4(%arg0: i32) -> (i32, i32) {
    %c0_i32 = arith.constant 0 : i32
    %c0_i32_0 = arith.constant 0 : i32
    %c0_i32_1 = arith.constant 0 : i32
    return %c0_i32, %c0_i32_0 : i32, i32
  }
  func.func @transform_5(%arg0: i32) -> (i32, i32, i32) {
    %c0_i32 = arith.constant 0 : i32
    %c0_i32_0 = arith.constant 0 : i32
    %c0_i32_1 = arith.constant 0 : i32
    return %arg0, %c0_i32, %c0_i32_0 : i32, i32, i32
  }
  func.func @transform_6(%arg0: i32) -> (i32, i32, i32) {
    %c0_i32 = arith.constant 0 : i32
    %c0_i32_0 = arith.constant 0 : i32
    %c0_i32_1 = arith.constant 0 : i32
    return %arg0, %c0_i32, %c0_i32_0 : i32, i32, i32
  }
  func.func @transform_7(%arg0: i32) -> (i32, i32, i32) {
    %c0_i32 = arith.constant 0 : i32
    %c0_i32_0 = arith.constant 0 : i32
    %c0_i32_1 = arith.constant 0 : i32
    return %arg0, %c0_i32, %c0_i32_0 : i32, i32, i32
  }
}

</mosaic_0001>

<llo_original>
// kernel: tpu_custom_call.1
$region0: #{tpu_custom_call.1}
  #allocation0 [shape = 'u32[]', space=smem, size = 0x4, offset = 0x4, fixed_abs, tag = 'smem constant byte address 0x4 - core index']
  #allocation1 [shape = 'u32[144,128]{1,0:T(1,128)}', space=vmem, size = 0x12000, scoped, tag = 'internal scratch']
  %s0 = inlined_call_operand.vmem [shape: bf16[2,16,32], index: 0, kind: input, shape index: {}]
  %s1 = inlined_call_operand.vmem [shape: f32[3,32], index: 1, kind: input, shape index: {}]
  %s2 = inlined_call_operand.vmem [shape: f32[1,3], index: 2, kind: input, shape index: {}]
  %s3 = inlined_call_operand.vmem [shape: f32[3,1], index: 3, kind: input, shape index: {}]
  %s4 = inlined_call_operand.vmem [shape: f32[16,16], index: 4, kind: input, shape index: {}]
  %s5 = inlined_call_operand.vmem [shape: f32[2,16,1], index: 5, kind: input, shape index: {}]
  %s6 = inlined_call_operand.vmem [shape: f32[2,1,16], index: 6, kind: input, shape index: {}]
  %s7 = inlined_call_operand.hbm [shape: f32[2,16,16], index: 7, kind: output, shape index: {}]
  %s8 = sld [smem:[#allocation0]]
  $region61: #{tpu_custom_call.1} parent=0
    _
  %s10 = ssub.s32 1, %s8
  %s11 = scalar_select 0, %s10, %s8
  $region1: #{tpu_custom_call.1} parent=0
    #allocation2 [shape = 'u8[16384]{0}', space=vmem, size = 0x4000, scoped, tag = 'output window, operand 0']
    #allocation3 [shape = 's32[2]{0}', space=sflag, size = 0x8, scoped, tag = 'scoped memory for tpu_custom_call.1']
    %12 = vsyncpa [#allocation3], 0
    %s13 = scalar_lea.sflag [#allocation3], 1
    %14 = vsyncpa %s13, 0
    loop: start=0, step=1, limit=4
    $region2: #{tpu_custom_call.1} parent=1 // loop_pre_header
      _
    $region3: #{tpu_custom_call.1} parent=1 // loop_header
      %s16 = sphi 0, %s20
      %p17 = scmp.ge.s32.totalorder %s16, 4
      %s26 = sphi 0, %s28
      %s29 = sphi 0, %s26
      %s30 = sphi 0, %s29
      %s46 = sphi 0, %s30
      %s50 = sphi 0, %s50
      %s52 = sphi 0, %s50
      %s53 = sphi 0, %s52
      %s67 = sphi 0, %s53
      %s71 = sphi 0, %s71
      %s73 = sphi 0, %s71
      %s74 = sphi 0, %s73
      %s88 = sphi 0, %s74
      %s92 = sphi 0, %s92
      %s94 = sphi 0, %s92
      %s95 = sphi 0, %s94
      %s109 = sphi 0, %s95
      %s113 = sphi 0, %s113
      %s115 = sphi 0, %s113
      %s116 = sphi 0, %s115
      %s130 = sphi 0, %s116
      %s136 = sphi 0, %s138
      %s139 = sphi 0, %s136
      %s140 = sphi 0, %s139
      %s156 = sphi 0, %s140
      %s162 = sphi 0, %s164
      %s165 = sphi 0, %s162
      %s166 = sphi 0, %s165
      %s182 = sphi 0, %s166
      %s188 = sphi 0, %s190
      %s191 = sphi 0, %s188
      %s192 = sphi 0, %s191
      %s208 = sphi 0, %s192
    $region4: #{tpu_custom_call.1} parent=1 // loop_header_branch
      %19 = sbr.rel (%p17) target = $region8
    $region5: #{tpu_custom_call.1} parent=1 // loop_body
      %s21 = ssub.s32 %s16, 1
      %s22 = ssub.s32 %s16, 2
      %s23 = sadd.s32 %s16, 1
      %s24 = ssub.s32 %s16, %s23
      %p25 = scmp.eq.s32.totalorder %s24, 0
      %s27 = sadd.s32 %s26, 1
      %s28 = scalar_select %p25, %s26, %s27
      %p31 = pneg %p25
      %p32 = scmp.eq.s32.totalorder %s16, 1
      %p33 = por %p31, %p32
      %p34 = scmp.ne.s32.totalorder %s26, %s29
      %p35 = scmp.eq.s32.totalorder %s16, 0
      %p36 = por %p34, %p35
      %p37 = scmp.ne.s32.totalorder %s26, %s29
      %p38 = scmp.eq.s32.totalorder %s21, 1
      %p39 = por %p37, %p38
      %p40 = scmp.ne.s32.totalorder %s29, %s30
      %p41 = scmp.eq.s32.totalorder %s21, 0
      %p42 = por %p40, %p41
      %p43 = scmp.ne.s32.totalorder %s29, %s30
      %p44 = scmp.eq.s32.totalorder %s22, 1
      %p45 = por %p43, %p44
      %p47 = scmp.ne.s32.totalorder %s30, %s46
      %p48 = scmp.eq.s32.totalorder %s22, 0
      %p49 = por %p47, %p48
      %s51 = sadd.s32 %s50, 1
      %p54 = scmp.eq.s32.totalorder %s16, 1
      %p55 = scmp.ne.s32.totalorder %s50, %s52
      %p56 = scmp.eq.s32.totalorder %s16, 0
      %p57 = por %p55, %p56
      %p58 = scmp.ne.s32.totalorder %s50, %s52
      %p59 = scmp.eq.s32.totalorder %s21, 1
      %p60 = por %p58, %p59
      %p61 = scmp.ne.s32.totalorder %s52, %s53
      %p62 = scmp.eq.s32.totalorder %s21, 0
      %p63 = por %p61, %p62
      %p64 = scmp.ne.s32.totalorder %s52, %s53
      %p65 = scmp.eq.s32.totalorder %s22, 1
      %p66 = por %p64, %p65
      %p68 = scmp.ne.s32.totalorder %s53, %s67
      %p69 = scmp.eq.s32.totalorder %s22, 0
      %p70 = por %p68, %p69
      %s72 = sadd.s32 %s71, 1
      %p75 = scmp.eq.s32.totalorder %s16, 1
      %p76 = scmp.ne.s32.totalorder %s71, %s73
      %p77 = scmp.eq.s32.totalorder %s16, 0
      %p78 = por %p76, %p77
      %p79 = scmp.ne.s32.totalorder %s71, %s73
      %p80 = scmp.eq.s32.totalorder %s21, 1
      %p81 = por %p79, %p80
      %p82 = scmp.ne.s32.totalorder %s73, %s74
      %p83 = scmp.eq.s32.totalorder %s21, 0
      %p84 = por %p82, %p83
      %p85 = scmp.ne.s32.totalorder %s73, %s74
      %p86 = scmp.eq.s32.totalorder %s22, 1
      %p87 = por %p85, %p86
      %p89 = scmp.ne.s32.totalorder %s74, %s88
      %p90 = scmp.eq.s32.totalorder %s22, 0
      %p91 = por %p89, %p90
      %s93 = sadd.s32 %s92, 1
      %p96 = scmp.eq.s32.totalorder %s16, 1
      %p97 = scmp.ne.s32.totalorder %s92, %s94
      %p98 = scmp.eq.s32.totalorder %s16, 0
      %p99 = por %p97, %p98
      %p100 = scmp.ne.s32.totalorder %s92, %s94
      %p101 = scmp.eq.s32.totalorder %s21, 1
      %p102 = por %p100, %p101
      %p103 = scmp.ne.s32.totalorder %s94, %s95
      %p104 = scmp.eq.s32.totalorder %s21, 0
      %p105 = por %p103, %p104
      %p106 = scmp.ne.s32.totalorder %s94, %s95
      %p107 = scmp.eq.s32.totalorder %s22, 1
      %p108 = por %p106, %p107
      %p110 = scmp.ne.s32.totalorder %s95, %s109
      %p111 = scmp.eq.s32.totalorder %s22, 0
      %p112 = por %p110, %p111
      %s114 = sadd.s32 %s113, 1
      %p117 = scmp.eq.s32.totalorder %s16, 1
      %p118 = scmp.ne.s32.totalorder %s113, %s115
      %p119 = scmp.eq.s32.totalorder %s16, 0
      %p120 = por %p118, %p119
      %p121 = scmp.ne.s32.totalorder %s113, %s115
      %p122 = scmp.eq.s32.totalorder %s21, 1
      %p123 = por %p121, %p122
      %p124 = scmp.ne.s32.totalorder %s115, %s116
      %p125 = scmp.eq.s32.totalorder %s21, 0
      %p126 = por %p124, %p125
      %p127 = scmp.ne.s32.totalorder %s115, %s116
      %p128 = scmp.eq.s32.totalorder %s22, 1
      %p129 = por %p127, %p128
      %p131 = scmp.ne.s32.totalorder %s116, %s130
      %p132 = scmp.eq.s32.totalorder %s22, 0
      %p133 = por %p131, %p132
      %s134 = ssub.s32 %s16, %s23
      %p135 = scmp.eq.s32.totalorder %s134, 0
      %s137 = sadd.s32 %s136, 1
      %s138 = scalar_select %p135, %s136, %s137
      %p141 = pneg %p135
      %p142 = scmp.eq.s32.totalorder %s16, 1
      %p143 = por %p141, %p142
      %p144 = scmp.ne.s32.totalorder %s136, %s139
      %p145 = scmp.eq.s32.totalorder %s16, 0
      %p146 = por %p144, %p145
      %p147 = scmp.ne.s32.totalorder %s136, %s139
      %p148 = scmp.eq.s32.totalorder %s21, 1
      %p149 = por %p147, %p148
      %p150 = scmp.ne.s32.totalorder %s139, %s140
      %p151 = scmp.eq.s32.totalorder %s21, 0
      %p152 = por %p150, %p151
      %p153 = scmp.ne.s32.totalorder %s139, %s140
      %p154 = scmp.eq.s32.totalorder %s22, 1
      %p155 = por %p153, %p154
      %p157 = scmp.ne.s32.totalorder %s140, %s156
      %p158 = scmp.eq.s32.totalorder %s22, 0
      %p159 = por %p157, %p158
      %s160 = ssub.s32 %s16, %s23
      %p161 = scmp.eq.s32.totalorder %s160, 0
      %s163 = sadd.s32 %s162, 1
      %s164 = scalar_select %p161, %s162, %s163
      %p167 = pneg %p161
      %p168 = scmp.eq.s32.totalorder %s16, 1
      %p169 = por %p167, %p168
      %p170 = scmp.ne.s32.totalorder %s162, %s165
      %p171 = scmp.eq.s32.totalorder %s16, 0
      %p172 = por %p170, %p171
      %p173 = scmp.ne.s32.totalorder %s162, %s165
      %p174 = scmp.eq.s32.totalorder %s21, 1
      %p175 = por %p173, %p174
      %p176 = scmp.ne.s32.totalorder %s165, %s166
      %p177 = scmp.eq.s32.totalorder %s21, 0
      %p178 = por %p176, %p177
      %p179 = scmp.ne.s32.totalorder %s165, %s166
      %p180 = scmp.eq.s32.totalorder %s22, 1
      %p181 = por %p179, %p180
      %p183 = scmp.ne.s32.totalorder %s166, %s182
      %p184 = scmp.eq.s32.totalorder %s22, 0
      %p185 = por %p183, %p184
      %s186 = ssub.s32 %s16, %s23
      %p187 = scmp.eq.s32.totalorder %s186, 0
      %s189 = sadd.s32 %s188, 1
      %s190 = scalar_select %p187, %s188, %s189
      %p193 = pneg %p187
      %p194 = scmp.eq.s32.totalorder %s16, 1
      %p195 = por %p193, %p194
      %p196 = scmp.ne.s32.totalorder %s188, %s191
      %p197 = scmp.eq.s32.totalorder %s16, 0
      %p198 = por %p196, %p197
      %p199 = scmp.ne.s32.totalorder %s188, %s191
      %p200 = scmp.eq.s32.totalorder %s21, 1
      %p201 = por %p199, %p200
      %p202 = scmp.ne.s32.totalorder %s191, %s192
      %p203 = scmp.eq.s32.totalorder %s21, 0
      %p204 = por %p202, %p203
      %p205 = scmp.ne.s32.totalorder %s191, %s192
      %p206 = scmp.eq.s32.totalorder %s22, 1
      %p207 = por %p205, %p206
      %p209 = scmp.ne.s32.totalorder %s192, %s208
      %p210 = scmp.eq.s32.totalorder %s22, 0
      %p211 = por %p209, %p210
      %p212 = scmp.le.s32.totalorder 1, %s16
      %p213 = scmp.lt.s32.totalorder %s16, 3
      %p214 = pnand %p212, %p213
      %p215 = pneg %p214
      // Predicated region
      $region9: #{tpu_custom_call.1} parent=5 // pred_check
        _
      $region10: #{tpu_custom_call.1} parent=5 // pred_check_branch
        %217 = sbr.rel (%p214) target = $region12
      $region11: #{tpu_custom_call.1} parent=5 // pred_region
        %s218 = ssub.s32 %s16, 1
        // Predicated region
        $region13: #{tpu_custom_call.1} parent=11 // pred_check
          %p219 = pneg %p63
        $region14: #{tpu_custom_call.1} parent=11 // pred_check_branch
          %221 = sbr.rel (%p219) target = $region16
        $region15: #{tpu_custom_call.1} parent=11 // pred_region
          _
        $region16: #{tpu_custom_call.1} parent=11 // pred_fallthru
          _
        // Predicated region
        $region17: #{tpu_custom_call.1} parent=11 // pred_check
          %p222 = pneg %p84
        $region18: #{tpu_custom_call.1} parent=11 // pred_check_branch
          %224 = sbr.rel (%p222) target = $region20
        $region19: #{tpu_custom_call.1} parent=11 // pred_region
          _
        $region20: #{tpu_custom_call.1} parent=11 // pred_fallthru
          _
        // Predicated region
        $region21: #{tpu_custom_call.1} parent=11 // pred_check
          %p225 = pneg %p105
        $region22: #{tpu_custom_call.1} parent=11 // pred_check_branch
          %227 = sbr.rel (%p225) target = $region24
        $region23: #{tpu_custom_call.1} parent=11 // pred_region
          _
        $region24: #{tpu_custom_call.1} parent=11 // pred_fallthru
          _
        // Predicated region
        $region25: #{tpu_custom_call.1} parent=11 // pred_check
          %p228 = pneg %p126
        $region26: #{tpu_custom_call.1} parent=11 // pred_check_branch
          %230 = sbr.rel (%p228) target = $region28
        $region27: #{tpu_custom_call.1} parent=11 // pred_region
          _
        $region28: #{tpu_custom_call.1} parent=11 // pred_fallthru
          _
      $region12: #{tpu_custom_call.1} parent=5 // pred_fallthru
        _
      %p231 = scmp.lt.s32.totalorder %s16, 2
      // Predicated region
      $region29: #{tpu_custom_call.1} parent=5 // pred_check
        %p232 = pneg %p231
      $region30: #{tpu_custom_call.1} parent=5 // pred_check_branch
        %234 = sbr.rel (%p232) target = $region32
      $region31: #{tpu_custom_call.1} parent=5 // pred_region
        // Predicated region
        $region33: #{tpu_custom_call.1} parent=31 // pred_check
          %p235 = pneg %p36
        $region34: #{tpu_custom_call.1} parent=31 // pred_check_branch
          %237 = sbr.rel (%p235) target = $region36
        $region35: #{tpu_custom_call.1} parent=31 // pred_region
          %p238 = scmp.lt.s32.totalorder %s16, 1
          %s239 = scalar_select %p238, %s16, 1
          %s240 = smul.addr %s239, 2
          %s241 = smul.addr %s240, 4
          %s242 = scalar_lea.vmem %s0, %s241
        $region36: #{tpu_custom_call.1} parent=31 // pred_fallthru
          _
        // Predicated region
        $region37: #{tpu_custom_call.1} parent=31 // pred_check
          %p243 = pneg %p146
        $region38: #{tpu_custom_call.1} parent=31 // pred_check_branch
          %245 = sbr.rel (%p243) target = $region40
        $region39: #{tpu_custom_call.1} parent=31 // pred_region
          %p246 = scmp.lt.s32.totalorder %s16, 1
          %s247 = scalar_select %p246, %s16, 1
          %s248 = smul.addr %s247, 2
          %s249 = smul.addr %s248, 8
          %s250 = scalar_lea.vmem %s5, %s249
        $region40: #{tpu_custom_call.1} parent=31 // pred_fallthru
          _
        // Predicated region
        $region41: #{tpu_custom_call.1} parent=31 // pred_check
          %p251 = pneg %p172
        $region42: #{tpu_custom_call.1} parent=31 // pred_check_branch
          %253 = sbr.rel (%p251) target = $region44
        $region43: #{tpu_custom_call.1} parent=31 // pred_region
          %p254 = scmp.lt.s32.totalorder %s16, 1
          %s255 = scalar_select %p254, %s16, 1
          %s256 = scalar_lea.vmem %s6, %s255
        $region44: #{tpu_custom_call.1} parent=31 // pred_fallthru
          _
      $region32: #{tpu_custom_call.1} parent=5 // pred_fallthru
        _
      %p257 = scmp.le.s32.totalorder 1, %s16
      %p258 = scmp.lt.s32.totalorder %s16, 3
      %p259 = pnand %p257, %p258
      %p260 = pneg %p259
      // Predicated region
      $region45: #{tpu_custom_call.1} parent=5 // pred_check
        _
      $region46: #{tpu_custom_call.1} parent=5 // pred_check_branch
        %262 = sbr.rel (%p259) target = $region48
      $region47: #{tpu_custom_call.1} parent=5 // pred_region
        %s263 = ssub.s32 %s16, 1
        %p264 = scmp.lt.s32.totalorder %s21, 1
        %s265 = scalar_select %p264, %s21, 1
        %s266 = smul.addr %s265, 2
        %s267 = smul.addr %s266, 4
        %s268 = scalar_lea.vmem %s0, %s267
        %p269 = pneg %p42
        %p270 = pneg %p39
        %p271 = pneg %p63
        %p272 = pneg %p60
        %p273 = pneg %p84
        %p274 = pneg %p81
        %p275 = pneg %p105
        %p276 = pneg %p102
        %p277 = pneg %p126
        %p278 = pneg %p123
        %p279 = scmp.lt.s32.totalorder %s21, 1
        %s280 = scalar_select %p279, %s21, 1
        %s281 = smul.addr %s280, 2
        %s282 = smul.addr %s281, 8
        %s283 = scalar_lea.vmem %s5, %s282
        %p284 = pneg %p152
        %p285 = pneg %p149
        %p286 = scmp.lt.s32.totalorder %s21, 1
        %s287 = scalar_select %p286, %s21, 1
        %s288 = scalar_lea.vmem %s6, %s287
        %p289 = pneg %p178
        %p290 = pneg %p175
        %p291 = pneg %p204
        %p292 = pneg %p201
        %s293 = sand.u32 %s191, 1
        %s294 = scalar_lea.sflag [#allocation3], %s293
        %s295 = sand.u32 %s191, 1
        %s296 = smul.addr %s295, 16
        %s297 = scalar_lea.vmem [#allocation2], %s296
        %p298 = scmp.lt.s32.totalorder %s21, 1
        %s299 = scalar_select %p298, %s21, 1
        %s300 = smul.addr %s299, 2
        %s301 = smul.addr %s300, 4
        %s302 = scalar_lea.vmem %s0, %s301
        %p303 = scmp.lt.s32.totalorder %s21, 1
        %s304 = scalar_select %p303, %s21, 1
        %s305 = smul.addr %s304, 2
        %s306 = smul.addr %s305, 8
        %s307 = scalar_lea.vmem %s5, %s306
        %p308 = scmp.lt.s32.totalorder %s21, 1
        %s309 = scalar_select %p308, %s21, 1
        %s310 = scalar_lea.vmem %s6, %s309
        %v311 = vld [vmem:[%s302] sm:$0xf]
        %v312 = vld [vmem:[%s302 + $0x4] sm:$0xf]
        %v313 = vunpack.c.l.bf16 %v311
        %v314 = vunpack.c.l.bf16 %v312
        %v315 = vld [vmem:[%s1] sm:$0x7]
        %v316 = vld [vmem:[%s4] sm:$0xff]
        %v317 = vld [vmem:[%s4 + $0x8] sm:$0xff]
        %v318 = vld [vmem:[%s2] sm:$0x1]
        %v320 = vlaneseq
        %v321 = vshrl.u32 %v320, 7
        %v322 = vsub.s32 0, %v321
        %v323 = vrot.slane %v318, %v322
        %vm325 = vcmask 261120
        %v327 = vsel %vm325, %v313, 0
        %v330 = vsel %vm325, %v314, 0
        %v333 = vsel %vm325, %v315, 0
        %335 = vmatprep.subr.mxu0 0.0
        %336 = vmatpush1.xpose.msra.mxu0 0.0
        %337 = vmatprep.subr.mxu0 0.0
        %338 = vmatpush1.xpose.msra.mxu0 0.0
        %339 = vmatprep.subr.mxu0 0.0
        %340 = vmatpush1.xpose.msra.mxu0 0.0
        %341 = vmatprep.subr.mxu0 0.0
        %342 = vmatpush1.xpose.msra.mxu0 0.0
        %343 = vmatprep.subr.mxu0 0.0
        %344 = vmatpush1.xpose.msra.mxu0 0.0
        %345 = vmatprep.subr.mxu0 0.0
        %346 = vmatpush1.xpose.msra.mxu0 0.0
        %347 = vmatprep.subr.mxu0 0.0
        %348 = vmatpush1.xpose.msra.mxu0 0.0
        %349 = vmatprep.subr.mxu0 0.0
        %350 = vmatpush1.xpose.msra.mxu0 0.0
        %351 = vmatprep.subr.mxu0 0.0
        %352 = vmatpush1.xpose.msra.mxu0 0.0
        %353 = vmatprep.subr.mxu0 0.0
        %354 = vmatpush1.xpose.msra.mxu0 0.0
        %355 = vmatprep.subr.mxu0 0.0
        %356 = vmatpush1.xpose.msra.mxu0 0.0
        %357 = vmatprep.subr.mxu0 0.0
        %358 = vmatpush1.xpose.msra.mxu0 0.0
        %359 = vmatprep.subr.mxu0 0.0
        %360 = vmatpush1.xpose.msra.mxu0 0.0
        %361 = vmatprep.subr.mxu0 0.0
        %362 = vmatpush1.xpose.msra.mxu0 0.0
        %363 = vmatprep.subr.mxu0 0.0
        %364 = vmatpush1.xpose.msra.mxu0 0.0
        %365 = vmatprep.subr.mxu0 0.0
        %366 = vmatpush1.xpose.msra.mxu0 %v333
        %367 = vmatprep.subr.mxu0 0.0
        %368 = vmatpush2.xpose.msra.mxu0 0.0
        %369 = vmatprep.subr.mxu0 0.0
        %370 = vmatpush2.xpose.msra.mxu0 0.0
        %371 = vmatprep.subr.mxu0 0.0
        %372 = vmatpush2.xpose.msra.mxu0 0.0
        %373 = vmatprep.subr.mxu0 0.0
        %374 = vmatpush2.xpose.msra.mxu0 0.0
        %375 = vmatprep.subr.mxu0 0.0
        %376 = vmatpush2.xpose.msra.mxu0 0.0
        %377 = vmatprep.subr.mxu0 0.0
        %378 = vmatpush2.xpose.msra.mxu0 0.0
        %379 = vmatprep.subr.mxu0 0.0
        %380 = vmatpush2.xpose.msra.mxu0 0.0
        %381 = vmatprep.subr.mxu0 0.0
        %382 = vmatpush2.xpose.msra.mxu0 0.0
        %383 = vmatprep.subr.mxu0 0.0
        %384 = vmatpush2.xpose.msra.mxu0 0.0
        %385 = vmatprep.subr.mxu0 0.0
        %386 = vmatpush2.xpose.msra.mxu0 0.0
        %387 = vmatprep.subr.mxu0 0.0
        %388 = vmatpush2.xpose.msra.mxu0 0.0
        %389 = vmatprep.subr.mxu0 0.0
        %390 = vmatpush2.xpose.msra.mxu0 0.0
        %391 = vmatprep.subr.mxu0 0.0
        %392 = vmatpush2.xpose.msra.mxu0 0.0
        %393 = vmatprep.subr.mxu0 0.0
        %394 = vmatpush2.xpose.msra.mxu0 0.0
        %395 = vmatprep.subr.mxu0 0.0
        %396 = vmatpush2.xpose.msra.mxu0 0.0
        %397 = vmatprep.subr.mxu0 0.0
        %398 = vmatpush2.xpose.msra.mxu0 0.0
        %399 = vmatprep.mubr.f32.mxu0 0.0
        %400 = vmatmul.mubr.f32.gmra.mxu0 %v327
        %v401 = vpop.f32.mrf.mxu0
        %v402 = vadd.f32 %v323, %v401
        %v403 = vpop.f32.mrf.mxu0
        %404 = vmatprep.mubr.f32.mxu0 0.0
        %405 = vmatmul.mubr.f32.gmra.mxu0 %v330
        %v406 = vpop.f32.mrf.mxu0
        %v407 = vadd.f32 %v323, %v406
        %v408 = vpop.f32.mrf.mxu0
        %409 = vdwg.mxu0
        %v410 = vld [vmem:[%s3] sm:$0x7]
        %412 = vset.pattern.permute.xlu0 0
        %413 = vperm.xlu0 %412, %v410
        %v414 = vpop.permute.xlu0 %413
        %416 = vmatprep.subr.mxu0 0.0
        %417 = vmatpush1.xpose.msra.mxu0 0.0
        %418 = vmatprep.subr.mxu0 0.0
        %419 = vmatpush1.xpose.msra.mxu0 0.0
        %420 = vmatprep.subr.mxu0 0.0
        %421 = vmatpush1.xpose.msra.mxu0 0.0
        %422 = vmatprep.subr.mxu0 0.0
        %423 = vmatpush1.xpose.msra.mxu0 0.0
        %424 = vmatprep.subr.mxu0 0.0
        %425 = vmatpush1.xpose.msra.mxu0 0.0
        %426 = vmatprep.subr.mxu0 0.0
        %427 = vmatpush1.xpose.msra.mxu0 0.0
        %428 = vmatprep.subr.mxu0 0.0
        %429 = vmatpush1.xpose.msra.mxu0 0.0
        %430 = vmatprep.subr.mxu0 0.0
        %431 = vmatpush1.xpose.msra.mxu0 0.0
        %432 = vmatprep.subr.mxu0 0.0
        %433 = vmatpush1.xpose.msra.mxu0 0.0
        %434 = vmatprep.subr.mxu0 0.0
        %435 = vmatpush1.xpose.msra.mxu0 0.0
        %436 = vmatprep.subr.mxu0 0.0
        %437 = vmatpush1.xpose.msra.mxu0 0.0
        %438 = vmatprep.subr.mxu0 0.0
        %439 = vmatpush1.xpose.msra.mxu0 0.0
        %440 = vmatprep.subr.mxu0 0.0
        %441 = vmatpush1.xpose.msra.mxu0 0.0
        %442 = vmatprep.subr.mxu0 0.0
        %443 = vmatpush1.xpose.msra.mxu0 0.0
        %444 = vmatprep.subr.mxu0 0.0
        %445 = vmatpush1.xpose.msra.mxu0 %v330
        %446 = vmatprep.subr.mxu0 0.0
        %447 = vmatpush1.xpose.msra.mxu0 %v327
        %448 = vmatprep.subr.mxu0 0.0
        %449 = vmatpush2.xpose.msra.mxu0 0.0
        %450 = vmatprep.subr.mxu0 0.0
        %451 = vmatpush2.xpose.msra.mxu0 0.0
        %452 = vmatprep.subr.mxu0 0.0
        %453 = vmatpush2.xpose.msra.mxu0 0.0
        %454 = vmatprep.subr.mxu0 0.0
        %455 = vmatpush2.xpose.msra.mxu0 0.0
        %456 = vmatprep.subr.mxu0 0.0
        %457 = vmatpush2.xpose.msra.mxu0 0.0
        %458 = vmatprep.subr.mxu0 0.0
        %459 = vmatpush2.xpose.msra.mxu0 0.0
        %460 = vmatprep.subr.mxu0 0.0
        %461 = vmatpush2.xpose.msra.mxu0 0.0
        %462 = vmatprep.subr.mxu0 0.0
        %463 = vmatpush2.xpose.msra.mxu0 0.0
        %464 = vmatprep.subr.mxu0 0.0
        %465 = vmatpush2.xpose.msra.mxu0 0.0
        %466 = vmatprep.subr.mxu0 0.0
        %467 = vmatpush2.xpose.msra.mxu0 0.0
        %468 = vmatprep.subr.mxu0 0.0
        %469 = vmatpush2.xpose.msra.mxu0 0.0
        %470 = vmatprep.subr.mxu0 0.0
        %471 = vmatpush2.xpose.msra.mxu0 0.0
        %472 = vmatprep.subr.mxu0 0.0
        %473 = vmatpush2.xpose.msra.mxu0 0.0
        %474 = vmatprep.subr.mxu0 0.0
        %475 = vmatpush2.xpose.msra.mxu0 0.0
        %476 = vmatprep.subr.mxu0 0.0
        %477 = vmatpush2.xpose.msra.mxu0 0.0
        %478 = vmatprep.subr.mxu0 0.0
        %479 = vmatpush2.xpose.msra.mxu0 0.0
        %480 = vmatprep.mubr.f32.mxu0 0.0
        %481 = vmatmul.mubr.f32.gmra.mxu0 %v333
        %v482 = vpop.f32.mrf.mxu0
        %v483 = vadd.f32 %v414, %v482
        %v484 = vpop.f32.mrf.mxu0
        %485 = vdwg.mxu0
        %vm486 = vcmask 130048
        %v488 = vsel %vm486, %v483, 0
        %490 = vmatprep.subr.mxu0 0.0
        %491 = vmatpush1.msra.mxu0 0.0
        %492 = vmatprep.subr.mxu0 0.0
        %493 = vmatpush1.msra.mxu0 0.0
        %494 = vmatprep.subr.mxu0 0.0
        %495 = vmatpush1.msra.mxu0 0.0
        %496 = vmatprep.subr.mxu0 0.0
        %497 = vmatpush1.msra.mxu0 0.0
        %498 = vmatprep.subr.mxu0 0.0
        %499 = vmatpush1.msra.mxu0 0.0
        %500 = vmatprep.subr.mxu0 0.0
        %501 = vmatpush1.msra.mxu0 0.0
        %502 = vmatprep.subr.mxu0 0.0
        %503 = vmatpush1.msra.mxu0 0.0
        %504 = vmatprep.subr.mxu0 0.0
        %505 = vmatpush1.msra.mxu0 0.0
        %506 = vmatprep.subr.mxu0 0.0
        %507 = vmatpush1.msra.mxu0 0.0
        %508 = vmatprep.subr.mxu0 0.0
        %509 = vmatpush1.msra.mxu0 0.0
        %510 = vmatprep.subr.mxu0 0.0
        %511 = vmatpush1.msra.mxu0 0.0
        %512 = vmatprep.subr.mxu0 0.0
        %513 = vmatpush1.msra.mxu0 0.0
        %514 = vmatprep.subr.mxu0 0.0
        %515 = vmatpush1.msra.mxu0 0.0
        %516 = vmatprep.subr.mxu0 0.0
        %517 = vmatpush1.msra.mxu0 0.0
        %518 = vmatprep.subr.mxu0 0.0
        %519 = vmatpush1.msra.mxu0 %v317
        %520 = vmatprep.subr.mxu0 0.0
        %521 = vmatpush1.msra.mxu0 %v316
        %522 = vmatprep.subr.mxu0 0.0
        %523 = vmatpush2.msra.mxu0 0.0
        %524 = vmatprep.subr.mxu0 0.0
        %525 = vmatpush2.msra.mxu0 0.0
        %526 = vmatprep.subr.mxu0 0.0
        %527 = vmatpush2.msra.mxu0 0.0
        %528 = vmatprep.subr.mxu0 0.0
        %529 = vmatpush2.msra.mxu0 0.0
        %530 = vmatprep.subr.mxu0 0.0
        %531 = vmatpush2.msra.mxu0 0.0
        %532 = vmatprep.subr.mxu0 0.0
        %533 = vmatpush2.msra.mxu0 0.0
        %534 = vmatprep.subr.mxu0 0.0
        %535 = vmatpush2.msra.mxu0 0.0
        %536 = vmatprep.subr.mxu0 0.0
        %537 = vmatpush2.msra.mxu0 0.0
        %538 = vmatprep.subr.mxu0 0.0
        %539 = vmatpush2.msra.mxu0 0.0
        %540 = vmatprep.subr.mxu0 0.0
        %541 = vmatpush2.msra.mxu0 0.0
        %542 = vmatprep.subr.mxu0 0.0
        %543 = vmatpush2.msra.mxu0 0.0
        %544 = vmatprep.subr.mxu0 0.0
        %545 = vmatpush2.msra.mxu0 0.0
        %546 = vmatprep.subr.mxu0 0.0
        %547 = vmatpush2.msra.mxu0 0.0
        %548 = vmatprep.subr.mxu0 0.0
        %549 = vmatpush2.msra.mxu0 0.0
        %550 = vmatprep.subr.mxu0 0.0
        %551 = vmatpush2.msra.mxu0 0.0
        %552 = vmatprep.subr.mxu0 0.0
        %553 = vmatpush2.msra.mxu0 0.0
        %554 = vmatprep.mubr.f32.mxu0 0.0
        %555 = vmatmul.mubr.f32.gmra.mxu0 %v488
        %v556 = vpop.f32.mrf.mxu0
        %v557 = vadd.f32 0.0, %v556
        %v558 = vpop.f32.mrf.mxu0
        %559 = vdwg.mxu0
        %vm560 = vcmask 23552
        %v561 = vsel %vm560, %v402, 0.0
        %v562 = vsel %vm560, %v407, 0.0
        %v563 = vadd.f32 %v561, %v562
        %v564 = vrot.slane %v563, 4
        %v565 = vadd.f32 %v563, %v564
        %v566 = vrot.slane %v565, 2
        %v567 = vadd.f32 %v565, %v566
        %v568 = vrot.slane %v567, 1
        %v569 = vadd.f32 %v567, %v568
        %v571 = vsel %vm486, %v316, 0
        %v574 = vsel %vm486, %v317, 0
        %576 = vmatprep.subr.mxu0 0.0
        %577 = vmatpush1.msra.mxu0 0.0
        %578 = vmatprep.subr.mxu0 0.0
        %579 = vmatpush1.msra.mxu0 0.0
        %580 = vmatprep.subr.mxu0 0.0
        %581 = vmatpush1.msra.mxu0 0.0
        %582 = vmatprep.subr.mxu0 0.0
        %583 = vmatpush1.msra.mxu0 0.0
        %584 = vmatprep.subr.mxu0 0.0
        %585 = vmatpush1.msra.mxu0 0.0
        %586 = vmatprep.subr.mxu0 0.0
        %587 = vmatpush1.msra.mxu0 0.0
        %588 = vmatprep.subr.mxu0 0.0
        %589 = vmatpush1.msra.mxu0 0.0
        %590 = vmatprep.subr.mxu0 0.0
        %591 = vmatpush1.msra.mxu0 0.0
        %592 = vmatprep.subr.mxu0 0.0
        %593 = vmatpush1.msra.mxu0 0.0
        %594 = vmatprep.subr.mxu0 0.0
        %595 = vmatpush1.msra.mxu0 0.0
        %596 = vmatprep.subr.mxu0 0.0
        %597 = vmatpush1.msra.mxu0 0.0
        %598 = vmatprep.subr.mxu0 0.0
        %599 = vmatpush1.msra.mxu0 0.0
        %600 = vmatprep.subr.mxu0 0.0
        %601 = vmatpush1.msra.mxu0 0.0
        %602 = vmatprep.subr.mxu0 0.0
        %603 = vmatpush1.msra.mxu0 0.0
        %604 = vmatprep.subr.mxu0 0.0
        %605 = vmatpush1.msra.mxu0 %v407
        %606 = vmatprep.subr.mxu0 0.0
        %607 = vmatpush1.msra.mxu0 %v402
        %608 = vmatprep.subr.mxu0 0.0
        %609 = vmatpush2.msra.mxu0 0.0
        %610 = vmatprep.subr.mxu0 0.0
        %611 = vmatpush2.msra.mxu0 0.0
        %612 = vmatprep.subr.mxu0 0.0
        %613 = vmatpush2.msra.mxu0 0.0
        %614 = vmatprep.subr.mxu0 0.0
        %615 = vmatpush2.msra.mxu0 0.0
        %616 = vmatprep.subr.mxu0 0.0
        %617 = vmatpush2.msra.mxu0 0.0
        %618 = vmatprep.subr.mxu0 0.0
        %619 = vmatpush2.msra.mxu0 0.0
        %620 = vmatprep.subr.mxu0 0.0
        %621 = vmatpush2.msra.mxu0 0.0
        %622 = vmatprep.subr.mxu0 0.0
        %623 = vmatpush2.msra.mxu0 0.0
        %624 = vmatprep.subr.mxu0 0.0
        %625 = vmatpush2.msra.mxu0 0.0
        %626 = vmatprep.subr.mxu0 0.0
        %627 = vmatpush2.msra.mxu0 0.0
        %628 = vmatprep.subr.mxu0 0.0
        %629 = vmatpush2.msra.mxu0 0.0
        %630 = vmatprep.subr.mxu0 0.0
        %631 = vmatpush2.msra.mxu0 0.0
        %632 = vmatprep.subr.mxu0 0.0
        %633 = vmatpush2.msra.mxu0 0.0
        %634 = vmatprep.subr.mxu0 0.0
        %635 = vmatpush2.msra.mxu0 0.0
        %636 = vmatprep.subr.mxu0 0.0
        %637 = vmatpush2.msra.mxu0 0.0
        %638 = vmatprep.subr.mxu0 0.0
        %639 = vmatpush2.msra.mxu0 0.0
        %640 = vmatprep.mubr.f32.mxu0 0.0
        %641 = vmatmul.mubr.f32.gmra.mxu0 %v571
        %v642 = vpop.f32.mrf.mxu0
        %v643 = vadd.f32 0.0, %v642
        %v644 = vpop.f32.mrf.mxu0
        %645 = vmatprep.mubr.f32.mxu0 0.0
        %646 = vmatmul.mubr.f32.gmra.mxu0 %v574
        %v647 = vpop.f32.mrf.mxu0
        %v648 = vadd.f32 0.0, %v647
        %v649 = vpop.f32.mrf.mxu0
        %650 = vdwg.mxu0
        %v651 = vsub.f32 %v569, %v643
        %v652 = vsub.f32 %v569, %v648
        %655 = vrot.lane.b32.xlu0 %v651, 126
        %v656 = vpop.permute.xlu0 %655
        %657 = vrot.lane.b32.xlu0 %v652, 126
        %v658 = vpop.permute.xlu0 %657
        %v661 = vsub.f32 %v402, %v656
        %v662 = vsub.f32 %v407, %v658
        %v663 = vld [vmem:[%s307] sm:$0xff]
        %v664 = vld [vmem:[%s307 + $0x8] sm:$0xff]
        %v665 = vadd.f32 %v661, %v663
        %v666 = vadd.f32 %v662, %v664
        %v668 = vrot.slane %v557, 1
        %v670 = vadd.f32 %v483, %v668
        %v671 = vld [vmem:[%s310] sm:$0x1]
        %v673 = vlaneseq
        %v674 = vshrl.u32 %v673, 7
        %v675 = vsub.s32 0, %v674
        %v676 = vrot.slane %v671, %v675
        %v678 = vadd.f32 %v670, %v676
        %vm679 = vcmp.gt.f32.partialorder %v316, 0.0
        %vm680 = vcmp.gt.f32.partialorder %v317, 0.0
        %682 = vset.pattern.permute.xlu0 0
        %683 = vperm.xlu0 %682, %v665
        %v684 = vpop.permute.xlu0 %683
        %687 = vset.pattern.permute.xlu0 0
        %688 = vperm.xlu0 %687, %v666
        %v689 = vpop.permute.xlu0 %688
        %v691 = vlaneseq
        %v692 = vshrl.u32 %v691, 7
        %v693 = vsub.s32 1, %v692
        %v694 = vrot.slane %v678, %v693
        %v695 = vadd.f32 %v684, %v694
        %v696 = vadd.f32 %v689, %v694
        %v697 = vsel %vm679, %v695, -inf
        %v698 = vsel %vm680, %v696, -inf
        %699 = vst.msk [vmem:[%s297] sm:$0xff] %vm486, %v697
        %700 = vst.msk [vmem:[%s297 + $0x8] sm:$0xff] %vm486, %v698
        %s701 = sand.u32 %s191, 1
        %s702 = scalar_lea.sflag [#allocation3], %s701
        %s703 = sand.u32 %s191, 1
        %s704 = smul.addr %s703, 16
        %s705 = scalar_lea.vmem [#allocation2], %s704
        // Predicated region
        $region49: #{tpu_custom_call.1} parent=47 // pred_check
          %p706 = pneg %p201
        $region50: #{tpu_custom_call.1} parent=47 // pred_check_branch
          %708 = sbr.rel (%p706) target = $region52
        $region51: #{tpu_custom_call.1} parent=47 // pred_region
          %s710 = ssub.s32 256, 256
          %711 = vsyncadd %s702, %s710
          %s712 = smul.addr %s21, 2
          %s713 = smul.addr %s712, 128
          %s714 = scalar_lea.hbm %s7, %s713
          %s715 = sshll.u32 %s705, 4
          %s716 = int_to_ptr.vmem [resolvable:$true] %s715
          %721 = dma.vmem_to_hbm [thread:$0]  %s716, 256, %s714, %s702, 128, 128, 8
        $region52: #{tpu_custom_call.1} parent=47 // pred_fallthru
          _
      $region48: #{tpu_custom_call.1} parent=5 // pred_fallthru
        _
      %p722 = scmp.le.s32.totalorder 2, %s16
      // Predicated region
      $region53: #{tpu_custom_call.1} parent=5 // pred_check
        %p723 = pneg %p722
      $region54: #{tpu_custom_call.1} parent=5 // pred_check_branch
        %725 = sbr.rel (%p723) target = $region56
      $region55: #{tpu_custom_call.1} parent=5 // pred_region
        %s726 = ssub.s32 %s16, 2
        // Predicated region
        $region57: #{tpu_custom_call.1} parent=55 // pred_check
          %p727 = pneg %p207
        $region58: #{tpu_custom_call.1} parent=55 // pred_check_branch
          %729 = sbr.rel (%p727) target = $region60
        $region59: #{tpu_custom_call.1} parent=55 // pred_region
          %s730 = sand.u32 %s192, 1
          %s731 = scalar_lea.sflag [#allocation3], %s730
          %s732 = sand.u32 %s192, 1
          %s733 = smul.addr %s732, 16
          %s734 = scalar_lea.vmem [#allocation2], %s733
          %735 = dma.done %s731, 256
        $region60: #{tpu_custom_call.1} parent=55 // pred_fallthru
          _
      $region56: #{tpu_custom_call.1} parent=5 // pred_fallthru
        _
    $region6: #{tpu_custom_call.1} parent=1 // loop_footer
      %s20 = sadd.s32 1, %s16
    $region7: #{tpu_custom_call.1} parent=1 // loop_footer_branch
      %15 = sbr.rel target = $region3
    $region8: #{tpu_custom_call.1} parent=1 // loop_exit
      _
    %736 = vsyncpa [#allocation3], 1
    %s737 = scalar_lea.sflag [#allocation3], 1
    %738 = vsyncpa %s737, 1

</llo_original>
